<compile_context>
chip_gen: v7x
topology: tpu7x:2x2x1
jax: 0.10.0
libtpu: 0.0.40
codegen_flags: <defaults>
</compile_context>

<pallas_src>
import jax
import jax.numpy as jnp
from jax.experimental import pallas as pl
from jax.experimental.pallas import tpu as pltpu


def _round_up(n, m):
    return ((n + m - 1) // m) * m


def _make_vae_kernel(input_size, extra, features):
    """Builds the fused forward kernel with static slice offsets baked in."""
    x_end = input_size
    xp_end = input_size + extra

    def kernel(xin_ref,
               we1_ref, be1_ref, we2_ref, be2_ref,
               wd1_z_ref, wd1_xp_ref, bd1_ref,
               wd2_ref, bd2_ref, wd3_ref, bd3_ref,
               out_ref):
        xin = xin_ref[...]
        # Static lane slices, all inside one 128-lane tile (cheap, no copy
        # across (8,128) tile boundaries).
        x = xin[:, :x_end]
        xp = xin[:, x_end:xp_end]
        eps = xin[:, xp_end:]

        # ---- encoder ----
        h = jnp.dot(x, we1_ref[...], preferred_element_type=jnp.float32) + be1_ref[...]
        h = jnp.maximum(h, 0.0)
        enc = jnp.dot(h, we2_ref[...], preferred_element_type=jnp.float32) + be2_ref[...]
        mu = enc[:, :features]
        log_var = enc[:, features:]

        # ---- reparameterize ----
        z = mu + eps * jnp.exp(0.5 * log_var)

        # ---- decoder ----
        # concat([z, xp]) @ Wd1 done as a split matmul with host-pre-split
        # weights so no in-kernel concat feeds the MXU.
        d = (jnp.dot(z, wd1_z_ref[...], preferred_element_type=jnp.float32)
             + jnp.dot(xp, wd1_xp_ref[...], preferred_element_type=jnp.float32)
             + bd1_ref[...])
        d = jnp.maximum(d, 0.0)
        d = jnp.dot(d, wd2_ref[...], preferred_element_type=jnp.float32) + bd2_ref[...]
        d = jnp.maximum(d, 0.0)
        recon = jnp.dot(d, wd3_ref[...], preferred_element_type=jnp.float32) + bd3_ref[...]

        # Single lane-dense [tb, recon + 2F] store -> one output DMA stream.
        out_ref[...] = jnp.concatenate([recon, enc], axis=-1).astype(out_ref.dtype)

    return kernel


def linear_vae_forward(x, xp, eps, params, features, *, block_b=2048):
    """Fused LinearVAE forward on TPU via Pallas.

    x:   [B, input_size]
    xp:  [B, extra_decoder_input]
    eps: [B, features]  reparameterization noise (torch.randn_like(std) analog)
    Returns (reconstruction, mu, log_var).
    """
    B, input_size = x.shape
    extra = xp.shape[1]
    F = features
    reconstruct_size = params["wd3"].shape[1]
    out_width = reconstruct_size + 2 * F

    # Host-side one-time weight split for the decoder's concat([z, xp]) input.
    wd1_z = params["wd1"][:F, :]
    wd1_xp = params["wd1"][F:, :]

    # Batch tile: multiple of 8, large enough to amortize the ~0.35us/step
    # pipeline overhead, but clamped so the grid keeps >= 4 steps for megacore
    # sharding on v7x.  Even at tb=block_b=2048 the double-buffered streamed
    # tiles plus in-kernel intermediates are only a few MiB of VMEM.
    tb = max(8, min(block_b, _round_up(-(-B // 4), 8)))
    tb = _round_up(tb, 8)
    B_pad = _round_up(B, tb)
    nb = B_pad // tb

    # One lane-dense streamed input slab: [B, input_size + extra + F].
    xin = jnp.concatenate([x, xp, eps], axis=-1)
    in_width = xin.shape[1]
    if B_pad != B:
        # Zero padding: padded rows only ever see exp(0.5 * bias) -> finite;
        # they are sliced off below before returning.
        xin = jnp.pad(xin, ((0, B_pad - B), (0, 0)))

    weights = (params["we1"], params["be1"], params["we2"], params["be2"],
               wd1_z, wd1_xp, params["bd1"],
               params["wd2"], params["bd2"], params["wd3"], params["bd3"])

    def stream_spec(width):
        return pl.BlockSpec((tb, width), lambda i: (i, 0))

    def resident_spec(arr):
        return pl.BlockSpec(arr.shape, lambda i: (0, 0))

    kernel = _make_vae_kernel(input_size, extra, F)

    out = pl.pallas_call(
        kernel,
        out_shape=jax.ShapeDtypeStruct((B_pad, out_width), jnp.float32),
        grid_spec=pltpu.PrefetchScalarGridSpec(
            num_scalar_prefetch=0,
            grid=(nb,),
            in_specs=[stream_spec(in_width)] + [resident_spec(w) for w in weights],
            out_specs=stream_spec(out_width),
        ),
        compiler_params=pltpu.CompilerParams(
            dimension_semantics=("parallel",)),
    )(xin, *weights)

    out = out[:B]
    recon = out[:, :reconstruct_size]
    mu = out[:, reconstruct_size:reconstruct_size + F]
    log_var = out[:, reconstruct_size + F:]
    return recon, mu, log_var


def init_params(key, input_size, features, extra_decoder_input, reconstruct_size,
                hidden=64):
    """Deterministic parameter init (weights stored as [in, out])."""
    ks = jax.random.split(key, 5)

    def lin(k, fan_in, fan_out):
        bound = 1.0 / jnp.sqrt(fan_in)
        kw, kb = jax.random.split(k)
        w = jax.random.uniform(kw, (fan_in, fan_out), jnp.float32, -bound, bound)
        b = jax.random.uniform(kb, (1, fan_out), jnp.float32, -bound, bound)
        return w, b

    we1, be1 = lin(ks[0], input_size, hidden)
    we2, be2 = lin(ks[1], hidden, 2 * features)
    wd1, bd1 = lin(ks[2], features + extra_decoder_input, hidden)
    wd2, bd2 = lin(ks[3], hidden, hidden)
    wd3, bd3 = lin(ks[4], hidden, reconstruct_size)

    return dict(we1=we1, be1=be1, we2=we2, be2=be2,
                wd1=wd1, bd1=bd1, wd2=wd2, bd2=bd2, wd3=wd3, bd3=bd3)


def reference_forward(x, xp, eps, p, features):
    """Pure-JAX reference mirroring the PyTorch module's forward()."""
    h = jnp.maximum(x @ p["we1"] + p["be1"], 0.0)
    enc = h @ p["we2"] + p["be2"]
    mu = enc[:, :features]
    log_var = enc[:, features:]
    z = mu + eps * jnp.exp(0.5 * log_var)
    dec_in = jnp.concatenate([z, xp], axis=-1)
    d = jnp.maximum(dec_in @ p["wd1"] + p["bd1"], 0.0)
    d = jnp.maximum(d @ p["wd2"] + p["bd2"], 0.0)
    recon = d @ p["wd3"] + p["bd3"]
    return recon, mu, log_var


if __name__ == "__main__":
    # Small, forward-consistent shapes (B not a multiple of 8 to exercise the
    # batch-padding path and a 2-step grid).
    B = 10
    INPUT_SIZE = 32
    FEATURES = 16
    EXTRA_DECODER_INPUT = 8
    RECONSTRUCT_SIZE = 32

    key = jax.random.PRNGKey(0)
    k_x, k_xp, k_eps, k_p = jax.random.split(key, 4)

    x = jax.random.normal(k_x, (B, INPUT_SIZE), jnp.float32)
    xp = jax.random.normal(k_xp, (B, EXTRA_DECODER_INPUT), jnp.float32)
    # torch.randn_like(std) noise — generated deterministically here and
    # shared between the kernel and the reference.
    eps = jax.random.normal(k_eps, (B, FEATURES), jnp.float32)

    params = init_params(k_p, INPUT_SIZE, FEATURES, EXTRA_DECODER_INPUT,
                         RECONSTRUCT_SIZE)

    recon, mu, log_var = linear_vae_forward(x, xp, eps, params, FEATURES)
    jax.block_until_ready((recon, mu, log_var))

    # Correctness check against the pure-JAX reference.
    r_ref, mu_ref, lv_ref = reference_forward(x, xp, eps, params, FEATURES)
    assert recon.shape == (B, RECONSTRUCT_SIZE)
    assert mu.shape == (B, FEATURES) and log_var.shape == (B, FEATURES)
    assert jnp.allclose(recon, r_ref, atol=1e-5, rtol=1e-5)
    assert jnp.allclose(mu, mu_ref, atol=1e-5, rtol=1e-5)
    assert jnp.allclose(log_var, lv_ref, atol=1e-5, rtol=1e-5)

    print("KERNEL_OK")
</pallas_src>

<mosaic_0001>
module attributes {stable_mosaic.version = 11 : i64} {
  func.func @kernel(%arg0: i32, %arg1: memref<8x56xf32, #tpu.memory_space<vmem>>, %arg2: memref<32x64xf32, #tpu.memory_space<vmem>>, %arg3: memref<1x64xf32, #tpu.memory_space<vmem>>, %arg4: memref<64x32xf32, #tpu.memory_space<vmem>>, %arg5: memref<1x32xf32, #tpu.memory_space<vmem>>, %arg6: memref<16x64xf32, #tpu.memory_space<vmem>>, %arg7: memref<8x64xf32, #tpu.memory_space<vmem>>, %arg8: memref<1x64xf32, #tpu.memory_space<vmem>>, %arg9: memref<64x64xf32, #tpu.memory_space<vmem>>, %arg10: memref<1x64xf32, #tpu.memory_space<vmem>>, %arg11: memref<64x32xf32, #tpu.memory_space<vmem>>, %arg12: memref<1x32xf32, #tpu.memory_space<vmem>>, %arg13: memref<8x64xf32, #tpu.memory_space<vmem>>) attributes {dimension_semantics = [#tpu.dimension_semantics<parallel>], iteration_bounds = array<i64: 2>, scalar_prefetch = 0 : i64, scratch_operands = 0 : i64, tpu.core_type = #tpu.core_type<tc>, window_params = [{transform_indices = @transform_0, window_bounds = array<i64: 8, 56>}, {pipeline_mode = #tpu.pipeline_mode<synchronous>, transform_indices = @transform_1, window_bounds = array<i64: 32, 64>}, {pipeline_mode = #tpu.pipeline_mode<synchronous>, transform_indices = @transform_2, window_bounds = array<i64: 1, 64>}, {pipeline_mode = #tpu.pipeline_mode<synchronous>, transform_indices = @transform_3, window_bounds = array<i64: 64, 32>}, {pipeline_mode = #tpu.pipeline_mode<synchronous>, transform_indices = @transform_4, window_bounds = array<i64: 1, 32>}, {pipeline_mode = #tpu.pipeline_mode<synchronous>, transform_indices = @transform_5, window_bounds = array<i64: 16, 64>}, {pipeline_mode = #tpu.pipeline_mode<synchronous>, transform_indices = @transform_6, window_bounds = array<i64: 8, 64>}, {pipeline_mode = #tpu.pipeline_mode<synchronous>, transform_indices = @transform_7, window_bounds = array<i64: 1, 64>}, {pipeline_mode = #tpu.pipeline_mode<synchronous>, transform_indices = @transform_8, window_bounds = array<i64: 64, 64>}, {pipeline_mode = #tpu.pipeline_mode<synchronous>, transform_indices = @transform_9, window_bounds = array<i64: 1, 64>}, {pipeline_mode = #tpu.pipeline_mode<synchronous>, transform_indices = @transform_10, window_bounds = array<i64: 64, 32>}, {pipeline_mode = #tpu.pipeline_mode<synchronous>, transform_indices = @transform_11, window_bounds = array<i64: 1, 32>}, {transform_indices = @transform_12, window_bounds = array<i64: 8, 64>}]} {
    %c0 = arith.constant 0 : index
    %c0_0 = arith.constant 0 : index
    %0 = vector.load %arg1[%c0, %c0_0] : memref<8x56xf32, #tpu.memory_space<vmem>>, vector<8x56xf32>
    %1 = vector.extract_strided_slice %0 {offsets = [0, 0], sizes = [8, 32], strides = [1, 1]} : vector<8x56xf32> to vector<8x32xf32>
    %2 = vector.extract_strided_slice %0 {offsets = [0, 32], sizes = [8, 8], strides = [1, 1]} : vector<8x56xf32> to vector<8x8xf32>
    %3 = vector.extract_strided_slice %0 {offsets = [0, 40], sizes = [8, 16], strides = [1, 1]} : vector<8x56xf32> to vector<8x16xf32>
    %c0_1 = arith.constant 0 : index
    %c0_2 = arith.constant 0 : index
    %4 = vector.load %arg2[%c0_1, %c0_2] : memref<32x64xf32, #tpu.memory_space<vmem>>, vector<32x64xf32>
    %cst = arith.constant dense<0.000000e+00> : vector<8x64xf32>
    %5 = tpu.matmul %1, %4, %cst {dimension_numbers = #tpu.dot_dimension_numbers<[1], [0], [0], [1], [0, 0, 1, 1], [], []>} : vector<8x32xf32>, vector<32x64xf32>, vector<8x64xf32> -> vector<8x64xf32>
    %c0_3 = arith.constant 0 : index
    %c0_4 = arith.constant 0 : index
    %6 = vector.load %arg3[%c0_3, %c0_4] : memref<1x64xf32, #tpu.memory_space<vmem>>, vector<1x64xf32>
    %7 = vector.broadcast %6 : vector<1x64xf32> to vector<8x64xf32>
    %8 = arith.addf %5, %7 : vector<8x64xf32>
    %cst_5 = arith.constant 0.000000e+00 : f32
    %9 = vector.broadcast %cst_5 : f32 to vector<8x64xf32>
    %10 = arith.maximumf %8, %9 : vector<8x64xf32>
    %c0_6 = arith.constant 0 : index
    %c0_7 = arith.constant 0 : index
    %11 = vector.load %arg4[%c0_6, %c0_7] : memref<64x32xf32, #tpu.memory_space<vmem>>, vector<64x32xf32>
    %cst_8 = arith.constant dense<0.000000e+00> : vector<8x32xf32>
    %12 = tpu.matmul %10, %11, %cst_8 {dimension_numbers = #tpu.dot_dimension_numbers<[1], [0], [0], [1], [0, 0, 1, 1], [], []>} : vector<8x64xf32>, vector<64x32xf32>, vector<8x32xf32> -> vector<8x32xf32>
    %c0_9 = arith.constant 0 : index
    %c0_10 = arith.constant 0 : index
    %13 = vector.load %arg5[%c0_9, %c0_10] : memref<1x32xf32, #tpu.memory_space<vmem>>, vector<1x32xf32>
    %14 = vector.broadcast %13 : vector<1x32xf32> to vector<8x32xf32>
    %15 = arith.addf %12, %14 : vector<8x32xf32>
    %16 = vector.extract_strided_slice %15 {offsets = [0, 0], sizes = [8, 16], strides = [1, 1]} : vector<8x32xf32> to vector<8x16xf32>
    %17 = vector.extract_strided_slice %15 {offsets = [0, 16], sizes = [8, 16], strides = [1, 1]} : vector<8x32xf32> to vector<8x16xf32>
    %cst_11 = arith.constant 5.000000e-01 : f32
    %18 = vector.broadcast %cst_11 : f32 to vector<8x16xf32>
    %19 = arith.mulf %18, %17 : vector<8x16xf32>
    %20 = math.exp %19 : vector<8x16xf32>
    %21 = arith.mulf %3, %20 : vector<8x16xf32>
    %22 = arith.addf %16, %21 : vector<8x16xf32>
    %c0_12 = arith.constant 0 : index
    %c0_13 = arith.constant 0 : index
    %23 = vector.load %arg6[%c0_12, %c0_13] : memref<16x64xf32, #tpu.memory_space<vmem>>, vector<16x64xf32>
    %cst_14 = arith.constant dense<0.000000e+00> : vector<8x64xf32>
    %24 = tpu.matmul %22, %23, %cst_14 {dimension_numbers = #tpu.dot_dimension_numbers<[1], [0], [0], [1], [0, 0, 1, 1], [], []>} : vector<8x16xf32>, vector<16x64xf32>, vector<8x64xf32> -> vector<8x64xf32>
    %c0_15 = arith.constant 0 : index
    %c0_16 = arith.constant 0 : index
    %25 = vector.load %arg7[%c0_15, %c0_16] : memref<8x64xf32, #tpu.memory_space<vmem>>, vector<8x64xf32>
    %cst_17 = arith.constant dense<0.000000e+00> : vector<8x64xf32>
    %26 = tpu.matmul %2, %25, %cst_17 {dimension_numbers = #tpu.dot_dimension_numbers<[1], [0], [0], [1], [0, 0, 1, 1], [], []>} : vector<8x8xf32>, vector<8x64xf32>, vector<8x64xf32> -> vector<8x64xf32>
    %27 = arith.addf %24, %26 : vector<8x64xf32>
    %c0_18 = arith.constant 0 : index
    %c0_19 = arith.constant 0 : index
    %28 = vector.load %arg8[%c0_18, %c0_19] : memref<1x64xf32, #tpu.memory_space<vmem>>, vector<1x64xf32>
    %29 = vector.broadcast %28 : vector<1x64xf32> to vector<8x64xf32>
    %30 = arith.addf %27, %29 : vector<8x64xf32>
    %cst_20 = arith.constant 0.000000e+00 : f32
    %31 = vector.broadcast %cst_20 : f32 to vector<8x64xf32>
    %32 = arith.maximumf %30, %31 : vector<8x64xf32>
    %c0_21 = arith.constant 0 : index
    %c0_22 = arith.constant 0 : index
    %33 = vector.load %arg9[%c0_21, %c0_22] : memref<64x64xf32, #tpu.memory_space<vmem>>, vector<64x64xf32>
    %cst_23 = arith.constant dense<0.000000e+00> : vector<8x64xf32>
    %34 = tpu.matmul %32, %33, %cst_23 {dimension_numbers = #tpu.dot_dimension_numbers<[1], [0], [0], [1], [0, 0, 1, 1], [], []>} : vector<8x64xf32>, vector<64x64xf32>, vector<8x64xf32> -> vector<8x64xf32>
    %c0_24 = arith.constant 0 : index
    %c0_25 = arith.constant 0 : index
    %35 = vector.load %arg10[%c0_24, %c0_25] : memref<1x64xf32, #tpu.memory_space<vmem>>, vector<1x64xf32>
    %36 = vector.broadcast %35 : vector<1x64xf32> to vector<8x64xf32>
    %37 = arith.addf %34, %36 : vector<8x64xf32>
    %cst_26 = arith.constant 0.000000e+00 : f32
    %38 = vector.broadcast %cst_26 : f32 to vector<8x64xf32>
    %39 = arith.maximumf %37, %38 : vector<8x64xf32>
    %c0_27 = arith.constant 0 : index
    %c0_28 = arith.constant 0 : index
    %40 = vector.load %arg11[%c0_27, %c0_28] : memref<64x32xf32, #tpu.memory_space<vmem>>, vector<64x32xf32>
    %cst_29 = arith.constant dense<0.000000e+00> : vector<8x32xf32>
    %41 = tpu.matmul %39, %40, %cst_29 {dimension_numbers = #tpu.dot_dimension_numbers<[1], [0], [0], [1], [0, 0, 1, 1], [], []>} : vector<8x64xf32>, vector<64x32xf32>, vector<8x32xf32> -> vector<8x32xf32>
    %c0_30 = arith.constant 0 : index
    %c0_31 = arith.constant 0 : index
    %42 = vector.load %arg12[%c0_30, %c0_31] : memref<1x32xf32, #tpu.memory_space<vmem>>, vector<1x32xf32>
    %43 = vector.broadcast %42 : vector<1x32xf32> to vector<8x32xf32>
    %44 = arith.addf %41, %43 : vector<8x32xf32>
    %45 = tpu.concatenate %44, %15 in 1 : vector<8x32xf32>, vector<8x32xf32> -> vector<8x64xf32>
    %c0_32 = arith.constant 0 : index
    %c0_33 = arith.constant 0 : index
    %46 = vector.load %arg13[%c0_32, %c0_33] : memref<8x64xf32, #tpu.memory_space<vmem>>, vector<8x64xf32>
    tpu.vector_store %arg13[%c0_32, %c0_33], %45 {strides = array<i32>} : memref<8x64xf32, #tpu.memory_space<vmem>>, vector<8x64xf32>,
    return
  }
  func.func @transform_0(%arg0: i32) -> (i32, i32) {
    %c0_i32 = arith.constant 0 : i32
    %c0_i32_0 = arith.constant 0 : i32
    return %arg0, %c0_i32 : i32, i32
  }
  func.func @transform_1(%arg0: i32) -> (i32, i32) {
    %c0_i32 = arith.constant 0 : i32
    %c0_i32_0 = arith.constant 0 : i32
    %c0_i32_1 = arith.constant 0 : i32
    return %c0_i32, %c0_i32_0 : i32, i32
  }
  func.func @transform_2(%arg0: i32) -> (i32, i32) {
    %c0_i32 = arith.constant 0 : i32
    %c0_i32_0 = arith.constant 0 : i32
    %c0_i32_1 = arith.constant 0 : i32
    return %c0_i32, %c0_i32_0 : i32, i32
  }
  func.func @transform_3(%arg0: i32) -> (i32, i32) {
    %c0_i32 = arith.constant 0 : i32
    %c0_i32_0 = arith.constant 0 : i32
    %c0_i32_1 = arith.constant 0 : i32
    return %c0_i32, %c0_i32_0 : i32, i32
  }
  func.func @transform_4(%arg0: i32) -> (i32, i32) {
    %c0_i32 = arith.constant 0 : i32
    %c0_i32_0 = arith.constant 0 : i32
    %c0_i32_1 = arith.constant 0 : i32
    return %c0_i32, %c0_i32_0 : i32, i32
  }
  func.func @transform_5(%arg0: i32) -> (i32, i32) {
    %c0_i32 = arith.constant 0 : i32
    %c0_i32_0 = arith.constant 0 : i32
    %c0_i32_1 = arith.constant 0 : i32
    return %c0_i32, %c0_i32_0 : i32, i32
  }
  func.func @transform_6(%arg0: i32) -> (i32, i32) {
    %c0_i32 = arith.constant 0 : i32
    %c0_i32_0 = arith.constant 0 : i32
    %c0_i32_1 = arith.constant 0 : i32
    return %c0_i32, %c0_i32_0 : i32, i32
  }
  func.func @transform_7(%arg0: i32) -> (i32, i32) {
    %c0_i32 = arith.constant 0 : i32
    %c0_i32_0 = arith.constant 0 : i32
    %c0_i32_1 = arith.constant 0 : i32
    return %c0_i32, %c0_i32_0 : i32, i32
  }
  func.func @transform_8(%arg0: i32) -> (i32, i32) {
    %c0_i32 = arith.constant 0 : i32
    %c0_i32_0 = arith.constant 0 : i32
    %c0_i32_1 = arith.constant 0 : i32
    return %c0_i32, %c0_i32_0 : i32, i32
  }
  func.func @transform_9(%arg0: i32) -> (i32, i32) {
    %c0_i32 = arith.constant 0 : i32
    %c0_i32_0 = arith.constant 0 : i32
    %c0_i32_1 = arith.constant 0 : i32
    return %c0_i32, %c0_i32_0 : i32, i32
  }
  func.func @transform_10(%arg0: i32) -> (i32, i32) {
    %c0_i32 = arith.constant 0 : i32
    %c0_i32_0 = arith.constant 0 : i32
    %c0_i32_1 = arith.constant 0 : i32
    return %c0_i32, %c0_i32_0 : i32, i32
  }
  func.func @transform_11(%arg0: i32) -> (i32, i32) {
    %c0_i32 = arith.constant 0 : i32
    %c0_i32_0 = arith.constant 0 : i32
    %c0_i32_1 = arith.constant 0 : i32
    return %c0_i32, %c0_i32_0 : i32, i32
  }
  func.func @transform_12(%arg0: i32) -> (i32, i32) {
    %c0_i32 = arith.constant 0 : i32
    %c0_i32_0 = arith.constant 0 : i32
    return %arg0, %c0_i32 : i32, i32
  }
}

</mosaic_0001>

<llo_original>
// kernel: tpu_custom_call.1
$region0: #{tpu_custom_call.1}
  #allocation0 [shape = 'u32[]', space=smem, size = 0x4, offset = 0x4, fixed_abs, tag = 'smem constant byte address 0x4 - core index']
  #allocation1 [shape = 'u32[144,128]{1,0:T(1,128)}', space=vmem, size = 0x12000, scoped, tag = 'internal scratch']
  %s0 = inlined_call_operand.vmem [shape: f32[16,56], index: 0, kind: input, shape index: {}]
  %s1 = inlined_call_operand.vmem [shape: f32[32,64], index: 1, kind: input, shape index: {}]
  %s2 = inlined_call_operand.vmem [shape: f32[1,64], index: 2, kind: input, shape index: {}]
  %s3 = inlined_call_operand.vmem [shape: f32[64,32], index: 3, kind: input, shape index: {}]
  %s4 = inlined_call_operand.vmem [shape: f32[1,32], index: 4, kind: input, shape index: {}]
  %s5 = inlined_call_operand.vmem [shape: f32[16,64], index: 5, kind: input, shape index: {}]
  %s6 = inlined_call_operand.vmem [shape: f32[8,64], index: 6, kind: input, shape index: {}]
  %s7 = inlined_call_operand.vmem [shape: f32[1,64], index: 7, kind: input, shape index: {}]
  %s8 = inlined_call_operand.vmem [shape: f32[64,64], index: 8, kind: input, shape index: {}]
  %s9 = inlined_call_operand.vmem [shape: f32[1,64], index: 9, kind: input, shape index: {}]
  %s10 = inlined_call_operand.vmem [shape: f32[64,32], index: 10, kind: input, shape index: {}]
  %s11 = inlined_call_operand.vmem [shape: f32[1,32], index: 11, kind: input, shape index: {}]
  %s12 = inlined_call_operand.hbm [shape: f32[16,64], index: 12, kind: output, shape index: {}]
  %s13 = sld [smem:[#allocation0]]
  $region81: #{tpu_custom_call.1} parent=0
    _
  %s15 = ssub.s32 1, %s13
  %s16 = scalar_select 0, %s15, %s13
  $region1: #{tpu_custom_call.1} parent=0
    #allocation2 [shape = 'u8[8192]{0}', space=vmem, size = 0x2000, scoped, tag = 'output window, operand 0']
    #allocation3 [shape = 's32[2]{0}', space=sflag, size = 0x8, scoped, tag = 'scoped memory for tpu_custom_call.1']
    %17 = vsyncpa [#allocation3], 0
    %s18 = scalar_lea.sflag [#allocation3], 1
    %19 = vsyncpa %s18, 0
    loop: start=0, step=1, limit=4
    $region2: #{tpu_custom_call.1} parent=1 // loop_pre_header
      _
    $region3: #{tpu_custom_call.1} parent=1 // loop_header
      %s21 = sphi 0, %s25
      %p22 = scmp.ge.s32.totalorder %s21, 4
      %s31 = sphi 0, %s33
      %s34 = sphi 0, %s31
      %s35 = sphi 0, %s34
      %s51 = sphi 0, %s35
      %s55 = sphi 0, %s55
      %s57 = sphi 0, %s55
      %s58 = sphi 0, %s57
      %s72 = sphi 0, %s58
      %s76 = sphi 0, %s76
      %s78 = sphi 0, %s76
      %s79 = sphi 0, %s78
      %s93 = sphi 0, %s79
      %s97 = sphi 0, %s97
      %s99 = sphi 0, %s97
      %s100 = sphi 0, %s99
      %s114 = sphi 0, %s100
      %s118 = sphi 0, %s118
      %s120 = sphi 0, %s118
      %s121 = sphi 0, %s120
      %s135 = sphi 0, %s121
      %s139 = sphi 0, %s139
      %s141 = sphi 0, %s139
      %s142 = sphi 0, %s141
      %s156 = sphi 0, %s142
      %s160 = sphi 0, %s160
      %s162 = sphi 0, %s160
      %s163 = sphi 0, %s162
      %s177 = sphi 0, %s163
      %s181 = sphi 0, %s181
      %s183 = sphi 0, %s181
      %s184 = sphi 0, %s183
      %s198 = sphi 0, %s184
      %s202 = sphi 0, %s202
      %s204 = sphi 0, %s202
      %s205 = sphi 0, %s204
      %s219 = sphi 0, %s205
      %s223 = sphi 0, %s223
      %s225 = sphi 0, %s223
      %s226 = sphi 0, %s225
      %s240 = sphi 0, %s226
      %s244 = sphi 0, %s244
      %s246 = sphi 0, %s244
      %s247 = sphi 0, %s246
      %s261 = sphi 0, %s247
      %s265 = sphi 0, %s265
      %s267 = sphi 0, %s265
      %s268 = sphi 0, %s267
      %s282 = sphi 0, %s268
      %s288 = sphi 0, %s290
      %s291 = sphi 0, %s288
      %s292 = sphi 0, %s291
      %s308 = sphi 0, %s292
    $region4: #{tpu_custom_call.1} parent=1 // loop_header_branch
      %24 = sbr.rel (%p22) target = $region8
    $region5: #{tpu_custom_call.1} parent=1 // loop_body
      %s26 = ssub.s32 %s21, 1
      %s27 = ssub.s32 %s21, 2
      %s28 = sadd.s32 %s21, 1
      %s29 = ssub.s32 %s21, %s28
      %p30 = scmp.eq.s32.totalorder %s29, 0
      %s32 = sadd.s32 %s31, 1
      %s33 = scalar_select %p30, %s31, %s32
      %p36 = pneg %p30
      %p37 = scmp.eq.s32.totalorder %s21, 1
      %p38 = por %p36, %p37
      %p39 = scmp.ne.s32.totalorder %s31, %s34
      %p40 = scmp.eq.s32.totalorder %s21, 0
      %p41 = por %p39, %p40
      %p42 = scmp.ne.s32.totalorder %s31, %s34
      %p43 = scmp.eq.s32.totalorder %s26, 1
      %p44 = por %p42, %p43
      %p45 = scmp.ne.s32.totalorder %s34, %s35
      %p46 = scmp.eq.s32.totalorder %s26, 0
      %p47 = por %p45, %p46
      %p48 = scmp.ne.s32.totalorder %s34, %s35
      %p49 = scmp.eq.s32.totalorder %s27, 1
      %p50 = por %p48, %p49
      %p52 = scmp.ne.s32.totalorder %s35, %s51
      %p53 = scmp.eq.s32.totalorder %s27, 0
      %p54 = por %p52, %p53
      %s56 = sadd.s32 %s55, 1
      %p59 = scmp.eq.s32.totalorder %s21, 1
      %p60 = scmp.ne.s32.totalorder %s55, %s57
      %p61 = scmp.eq.s32.totalorder %s21, 0
      %p62 = por %p60, %p61
      %p63 = scmp.ne.s32.totalorder %s55, %s57
      %p64 = scmp.eq.s32.totalorder %s26, 1
      %p65 = por %p63, %p64
      %p66 = scmp.ne.s32.totalorder %s57, %s58
      %p67 = scmp.eq.s32.totalorder %s26, 0
      %p68 = por %p66, %p67
      %p69 = scmp.ne.s32.totalorder %s57, %s58
      %p70 = scmp.eq.s32.totalorder %s27, 1
      %p71 = por %p69, %p70
      %p73 = scmp.ne.s32.totalorder %s58, %s72
      %p74 = scmp.eq.s32.totalorder %s27, 0
      %p75 = por %p73, %p74
      %s77 = sadd.s32 %s76, 1
      %p80 = scmp.eq.s32.totalorder %s21, 1
      %p81 = scmp.ne.s32.totalorder %s76, %s78
      %p82 = scmp.eq.s32.totalorder %s21, 0
      %p83 = por %p81, %p82
      %p84 = scmp.ne.s32.totalorder %s76, %s78
      %p85 = scmp.eq.s32.totalorder %s26, 1
      %p86 = por %p84, %p85
      %p87 = scmp.ne.s32.totalorder %s78, %s79
      %p88 = scmp.eq.s32.totalorder %s26, 0
      %p89 = por %p87, %p88
      %p90 = scmp.ne.s32.totalorder %s78, %s79
      %p91 = scmp.eq.s32.totalorder %s27, 1
      %p92 = por %p90, %p91
      %p94 = scmp.ne.s32.totalorder %s79, %s93
      %p95 = scmp.eq.s32.totalorder %s27, 0
      %p96 = por %p94, %p95
      %s98 = sadd.s32 %s97, 1
      %p101 = scmp.eq.s32.totalorder %s21, 1
      %p102 = scmp.ne.s32.totalorder %s97, %s99
      %p103 = scmp.eq.s32.totalorder %s21, 0
      %p104 = por %p102, %p103
      %p105 = scmp.ne.s32.totalorder %s97, %s99
      %p106 = scmp.eq.s32.totalorder %s26, 1
      %p107 = por %p105, %p106
      %p108 = scmp.ne.s32.totalorder %s99, %s100
      %p109 = scmp.eq.s32.totalorder %s26, 0
      %p110 = por %p108, %p109
      %p111 = scmp.ne.s32.totalorder %s99, %s100
      %p112 = scmp.eq.s32.totalorder %s27, 1
      %p113 = por %p111, %p112
      %p115 = scmp.ne.s32.totalorder %s100, %s114
      %p116 = scmp.eq.s32.totalorder %s27, 0
      %p117 = por %p115, %p116
      %s119 = sadd.s32 %s118, 1
      %p122 = scmp.eq.s32.totalorder %s21, 1
      %p123 = scmp.ne.s32.totalorder %s118, %s120
      %p124 = scmp.eq.s32.totalorder %s21, 0
      %p125 = por %p123, %p124
      %p126 = scmp.ne.s32.totalorder %s118, %s120
      %p127 = scmp.eq.s32.totalorder %s26, 1
      %p128 = por %p126, %p127
      %p129 = scmp.ne.s32.totalorder %s120, %s121
      %p130 = scmp.eq.s32.totalorder %s26, 0
      %p131 = por %p129, %p130
      %p132 = scmp.ne.s32.totalorder %s120, %s121
      %p133 = scmp.eq.s32.totalorder %s27, 1
      %p134 = por %p132, %p133
      %p136 = scmp.ne.s32.totalorder %s121, %s135
      %p137 = scmp.eq.s32.totalorder %s27, 0
      %p138 = por %p136, %p137
      %s140 = sadd.s32 %s139, 1
      %p143 = scmp.eq.s32.totalorder %s21, 1
      %p144 = scmp.ne.s32.totalorder %s139, %s141
      %p145 = scmp.eq.s32.totalorder %s21, 0
      %p146 = por %p144, %p145
      %p147 = scmp.ne.s32.totalorder %s139, %s141
      %p148 = scmp.eq.s32.totalorder %s26, 1
      %p149 = por %p147, %p148
      %p150 = scmp.ne.s32.totalorder %s141, %s142
      %p151 = scmp.eq.s32.totalorder %s26, 0
      %p152 = por %p150, %p151
      %p153 = scmp.ne.s32.totalorder %s141, %s142
      %p154 = scmp.eq.s32.totalorder %s27, 1
      %p155 = por %p153, %p154
      %p157 = scmp.ne.s32.totalorder %s142, %s156
      %p158 = scmp.eq.s32.totalorder %s27, 0
      %p159 = por %p157, %p158
      %s161 = sadd.s32 %s160, 1
      %p164 = scmp.eq.s32.totalorder %s21, 1
      %p165 = scmp.ne.s32.totalorder %s160, %s162
      %p166 = scmp.eq.s32.totalorder %s21, 0
      %p167 = por %p165, %p166
      %p168 = scmp.ne.s32.totalorder %s160, %s162
      %p169 = scmp.eq.s32.totalorder %s26, 1
      %p170 = por %p168, %p169
      %p171 = scmp.ne.s32.totalorder %s162, %s163
      %p172 = scmp.eq.s32.totalorder %s26, 0
      %p173 = por %p171, %p172
      %p174 = scmp.ne.s32.totalorder %s162, %s163
      %p175 = scmp.eq.s32.totalorder %s27, 1
      %p176 = por %p174, %p175
      %p178 = scmp.ne.s32.totalorder %s163, %s177
      %p179 = scmp.eq.s32.totalorder %s27, 0
      %p180 = por %p178, %p179
      %s182 = sadd.s32 %s181, 1
      %p185 = scmp.eq.s32.totalorder %s21, 1
      %p186 = scmp.ne.s32.totalorder %s181, %s183
      %p187 = scmp.eq.s32.totalorder %s21, 0
      %p188 = por %p186, %p187
      %p189 = scmp.ne.s32.totalorder %s181, %s183
      %p190 = scmp.eq.s32.totalorder %s26, 1
      %p191 = por %p189, %p190
      %p192 = scmp.ne.s32.totalorder %s183, %s184
      %p193 = scmp.eq.s32.totalorder %s26, 0
      %p194 = por %p192, %p193
      %p195 = scmp.ne.s32.totalorder %s183, %s184
      %p196 = scmp.eq.s32.totalorder %s27, 1
      %p197 = por %p195, %p196
      %p199 = scmp.ne.s32.totalorder %s184, %s198
      %p200 = scmp.eq.s32.totalorder %s27, 0
      %p201 = por %p199, %p200
      %s203 = sadd.s32 %s202, 1
      %p206 = scmp.eq.s32.totalorder %s21, 1
      %p207 = scmp.ne.s32.totalorder %s202, %s204
      %p208 = scmp.eq.s32.totalorder %s21, 0
      %p209 = por %p207, %p208
      %p210 = scmp.ne.s32.totalorder %s202, %s204
      %p211 = scmp.eq.s32.totalorder %s26, 1
      %p212 = por %p210, %p211
      %p213 = scmp.ne.s32.totalorder %s204, %s205
      %p214 = scmp.eq.s32.totalorder %s26, 0
      %p215 = por %p213, %p214
      %p216 = scmp.ne.s32.totalorder %s204, %s205
      %p217 = scmp.eq.s32.totalorder %s27, 1
      %p218 = por %p216, %p217
      %p220 = scmp.ne.s32.totalorder %s205, %s219
      %p221 = scmp.eq.s32.totalorder %s27, 0
      %p222 = por %p220, %p221
      %s224 = sadd.s32 %s223, 1
      %p227 = scmp.eq.s32.totalorder %s21, 1
      %p228 = scmp.ne.s32.totalorder %s223, %s225
      %p229 = scmp.eq.s32.totalorder %s21, 0
      %p230 = por %p228, %p229
      %p231 = scmp.ne.s32.totalorder %s223, %s225
      %p232 = scmp.eq.s32.totalorder %s26, 1
      %p233 = por %p231, %p232
      %p234 = scmp.ne.s32.totalorder %s225, %s226
      %p235 = scmp.eq.s32.totalorder %s26, 0
      %p236 = por %p234, %p235
      %p237 = scmp.ne.s32.totalorder %s225, %s226
      %p238 = scmp.eq.s32.totalorder %s27, 1
      %p239 = por %p237, %p238
      %p241 = scmp.ne.s32.totalorder %s226, %s240
      %p242 = scmp.eq.s32.totalorder %s27, 0
      %p243 = por %p241, %p242
      %s245 = sadd.s32 %s244, 1
      %p248 = scmp.eq.s32.totalorder %s21, 1
      %p249 = scmp.ne.s32.totalorder %s244, %s246
      %p250 = scmp.eq.s32.totalorder %s21, 0
      %p251 = por %p249, %p250
      %p252 = scmp.ne.s32.totalorder %s244, %s246
      %p253 = scmp.eq.s32.totalorder %s26, 1
      %p254 = por %p252, %p253
      %p255 = scmp.ne.s32.totalorder %s246, %s247
      %p256 = scmp.eq.s32.totalorder %s26, 0
      %p257 = por %p255, %p256
      %p258 = scmp.ne.s32.totalorder %s246, %s247
      %p259 = scmp.eq.s32.totalorder %s27, 1
      %p260 = por %p258, %p259
      %p262 = scmp.ne.s32.totalorder %s247, %s261
      %p263 = scmp.eq.s32.totalorder %s27, 0
      %p264 = por %p262, %p263
      %s266 = sadd.s32 %s265, 1
      %p269 = scmp.eq.s32.totalorder %s21, 1
      %p270 = scmp.ne.s32.totalorder %s265, %s267
      %p271 = scmp.eq.s32.totalorder %s21, 0
      %p272 = por %p270, %p271
      %p273 = scmp.ne.s32.totalorder %s265, %s267
      %p274 = scmp.eq.s32.totalorder %s26, 1
      %p275 = por %p273, %p274
      %p276 = scmp.ne.s32.totalorder %s267, %s268
      %p277 = scmp.eq.s32.totalorder %s26, 0
      %p278 = por %p276, %p277
      %p279 = scmp.ne.s32.totalorder %s267, %s268
      %p280 = scmp.eq.s32.totalorder %s27, 1
      %p281 = por %p279, %p280
      %p283 = scmp.ne.s32.totalorder %s268, %s282
      %p284 = scmp.eq.s32.totalorder %s27, 0
      %p285 = por %p283, %p284
      %s286 = ssub.s32 %s21, %s28
      %p287 = scmp.eq.s32.totalorder %s286, 0
      %s289 = sadd.s32 %s288, 1
      %s290 = scalar_select %p287, %s288, %s289
      %p293 = pneg %p287
      %p294 = scmp.eq.s32.totalorder %s21, 1
      %p295 = por %p293, %p294
      %p296 = scmp.ne.s32.totalorder %s288, %s291
      %p297 = scmp.eq.s32.totalorder %s21, 0
      %p298 = por %p296, %p297
      %p299 = scmp.ne.s32.totalorder %s288, %s291
      %p300 = scmp.eq.s32.totalorder %s26, 1
      %p301 = por %p299, %p300
      %p302 = scmp.ne.s32.totalorder %s291, %s292
      %p303 = scmp.eq.s32.totalorder %s26, 0
      %p304 = por %p302, %p303
      %p305 = scmp.ne.s32.totalorder %s291, %s292
      %p306 = scmp.eq.s32.totalorder %s27, 1
      %p307 = por %p305, %p306
      %p309 = scmp.ne.s32.totalorder %s292, %s308
      %p310 = scmp.eq.s32.totalorder %s27, 0
      %p311 = por %p309, %p310
      %p312 = scmp.le.s32.totalorder 1, %s21
      %p313 = scmp.lt.s32.totalorder %s21, 3
      %p314 = pnand %p312, %p313
      %p315 = pneg %p314
      // Predicated region
      $region9: #{tpu_custom_call.1} parent=5 // pred_check
        _
      $region10: #{tpu_custom_call.1} parent=5 // pred_check_branch
        %317 = sbr.rel (%p314) target = $region12
      $region11: #{tpu_custom_call.1} parent=5 // pred_region
        %s318 = ssub.s32 %s21, 1
        // Predicated region
        $region13: #{tpu_custom_call.1} parent=11 // pred_check
          %p319 = pneg %p68
        $region14: #{tpu_custom_call.1} parent=11 // pred_check_branch
          %321 = sbr.rel (%p319) target = $region16
        $region15: #{tpu_custom_call.1} parent=11 // pred_region
          _
        $region16: #{tpu_custom_call.1} parent=11 // pred_fallthru
          _
        // Predicated region
        $region17: #{tpu_custom_call.1} parent=11 // pred_check
          %p322 = pneg %p89
        $region18: #{tpu_custom_call.1} parent=11 // pred_check_branch
          %324 = sbr.rel (%p322) target = $region20
        $region19: #{tpu_custom_call.1} parent=11 // pred_region
          _
        $region20: #{tpu_custom_call.1} parent=11 // pred_fallthru
          _
        // Predicated region
        $region21: #{tpu_custom_call.1} parent=11 // pred_check
          %p325 = pneg %p110
        $region22: #{tpu_custom_call.1} parent=11 // pred_check_branch
          %327 = sbr.rel (%p325) target = $region24
        $region23: #{tpu_custom_call.1} parent=11 // pred_region
          _
        $region24: #{tpu_custom_call.1} parent=11 // pred_fallthru
          _
        // Predicated region
        $region25: #{tpu_custom_call.1} parent=11 // pred_check
          %p328 = pneg %p131
        $region26: #{tpu_custom_call.1} parent=11 // pred_check_branch
          %330 = sbr.rel (%p328) target = $region28
        $region27: #{tpu_custom_call.1} parent=11 // pred_region
          _
        $region28: #{tpu_custom_call.1} parent=11 // pred_fallthru
          _
        // Predicated region
        $region29: #{tpu_custom_call.1} parent=11 // pred_check
          %p331 = pneg %p152
        $region30: #{tpu_custom_call.1} parent=11 // pred_check_branch
          %333 = sbr.rel (%p331) target = $region32
        $region31: #{tpu_custom_call.1} parent=11 // pred_region
          _
        $region32: #{tpu_custom_call.1} parent=11 // pred_fallthru
          _
        // Predicated region
        $region33: #{tpu_custom_call.1} parent=11 // pred_check
          %p334 = pneg %p173
        $region34: #{tpu_custom_call.1} parent=11 // pred_check_branch
          %336 = sbr.rel (%p334) target = $region36
        $region35: #{tpu_custom_call.1} parent=11 // pred_region
          _
        $region36: #{tpu_custom_call.1} parent=11 // pred_fallthru
          _
        // Predicated region
        $region37: #{tpu_custom_call.1} parent=11 // pred_check
          %p337 = pneg %p194
        $region38: #{tpu_custom_call.1} parent=11 // pred_check_branch
          %339 = sbr.rel (%p337) target = $region40
        $region39: #{tpu_custom_call.1} parent=11 // pred_region
          _
        $region40: #{tpu_custom_call.1} parent=11 // pred_fallthru
          _
        // Predicated region
        $region41: #{tpu_custom_call.1} parent=11 // pred_check
          %p340 = pneg %p215
        $region42: #{tpu_custom_call.1} parent=11 // pred_check_branch
          %342 = sbr.rel (%p340) target = $region44
        $region43: #{tpu_custom_call.1} parent=11 // pred_region
          _
        $region44: #{tpu_custom_call.1} parent=11 // pred_fallthru
          _
        // Predicated region
        $region45: #{tpu_custom_call.1} parent=11 // pred_check
          %p343 = pneg %p236
        $region46: #{tpu_custom_call.1} parent=11 // pred_check_branch
          %345 = sbr.rel (%p343) target = $region48
        $region47: #{tpu_custom_call.1} parent=11 // pred_region
          _
        $region48: #{tpu_custom_call.1} parent=11 // pred_fallthru
          _
        // Predicated region
        $region49: #{tpu_custom_call.1} parent=11 // pred_check
          %p346 = pneg %p257
        $region50: #{tpu_custom_call.1} parent=11 // pred_check_branch
          %348 = sbr.rel (%p346) target = $region52
        $region51: #{tpu_custom_call.1} parent=11 // pred_region
          _
        $region52: #{tpu_custom_call.1} parent=11 // pred_fallthru
          _
        // Predicated region
        $region53: #{tpu_custom_call.1} parent=11 // pred_check
          %p349 = pneg %p278
        $region54: #{tpu_custom_call.1} parent=11 // pred_check_branch
          %351 = sbr.rel (%p349) target = $region56
        $region55: #{tpu_custom_call.1} parent=11 // pred_region
          _
        $region56: #{tpu_custom_call.1} parent=11 // pred_fallthru
          _
      $region12: #{tpu_custom_call.1} parent=5 // pred_fallthru
        _
      %p352 = scmp.lt.s32.totalorder %s21, 2
      // Predicated region
      $region57: #{tpu_custom_call.1} parent=5 // pred_check
        %p353 = pneg %p352
      $region58: #{tpu_custom_call.1} parent=5 // pred_check_branch
        %355 = sbr.rel (%p353) target = $region60
      $region59: #{tpu_custom_call.1} parent=5 // pred_region
        // Predicated region
        $region61: #{tpu_custom_call.1} parent=59 // pred_check
          %p356 = pneg %p41
        $region62: #{tpu_custom_call.1} parent=59 // pred_check_branch
          %358 = sbr.rel (%p356) target = $region64
        $region63: #{tpu_custom_call.1} parent=59 // pred_region
          %p359 = scmp.lt.s32.totalorder %s21, 1
          %s360 = scalar_select %p359, %s21, 1
          %s361 = smul.addr %s360, 8
          %s362 = scalar_lea.vmem %s0, %s361
        $region64: #{tpu_custom_call.1} parent=59 // pred_fallthru
          _
      $region60: #{tpu_custom_call.1} parent=5 // pred_fallthru
        _
      %p363 = scmp.le.s32.totalorder 1, %s21
      %p364 = scmp.lt.s32.totalorder %s21, 3
      %p365 = pnand %p363, %p364
      %p366 = pneg %p365
      // Predicated region
      $region65: #{tpu_custom_call.1} parent=5 // pred_check
        _
      $region66: #{tpu_custom_call.1} parent=5 // pred_check_branch
        %368 = sbr.rel (%p365) target = $region68
      $region67: #{tpu_custom_call.1} parent=5 // pred_region
        %s369 = ssub.s32 %s21, 1
        %p370 = scmp.lt.s32.totalorder %s26, 1
        %s371 = scalar_select %p370, %s26, 1
        %s372 = smul.addr %s371, 8
        %s373 = scalar_lea.vmem %s0, %s372
        %p374 = pneg %p47
        %p375 = pneg %p44
        %p376 = pneg %p68
        %p377 = pneg %p65
        %p378 = pneg %p89
        %p379 = pneg %p86
        %p380 = pneg %p110
        %p381 = pneg %p107
        %p382 = pneg %p131
        %p383 = pneg %p128
        %p384 = pneg %p152
        %p385 = pneg %p149
        %p386 = pneg %p173
        %p387 = pneg %p170
        %p388 = pneg %p194
        %p389 = pneg %p191
        %p390 = pneg %p215
        %p391 = pneg %p212
        %p392 = pneg %p236
        %p393 = pneg %p233
        %p394 = pneg %p257
        %p395 = pneg %p254
        %p396 = pneg %p278
        %p397 = pneg %p275
        %p398 = pneg %p304
        %p399 = pneg %p301
        %s400 = sand.u32 %s291, 1
        %s401 = scalar_lea.sflag [#allocation3], %s400
        %s402 = sand.u32 %s291, 1
        %s403 = smul.addr %s402, 8
        %s404 = scalar_lea.vmem [#allocation2], %s403
        %p405 = scmp.lt.s32.totalorder %s26, 1
        %s406 = scalar_select %p405, %s26, 1
        %s407 = smul.addr %s406, 8
        %s408 = scalar_lea.vmem %s0, %s407
        %v409 = vld [vmem:[%s408] sm:$0xff]
        %v410 = vld [vmem:[%s1] sm:$0xff]
        %v411 = vld [vmem:[%s1 + $0x8] sm:$0xff]
        %v412 = vld [vmem:[%s1 + $0x10] sm:$0xff]
        %v413 = vld [vmem:[%s1 + $0x18] sm:$0xff]
        %v414 = vld [vmem:[%s2] sm:$0x1]
        %v416 = vlaneseq
        %v417 = vshrl.u32 %v416, 7
        %v418 = vsub.s32 0, %v417
        %v419 = vrot.slane %v414, %v418
        %vm421 = vcmask 261120
        %v423 = vsel %vm421, %v409, 0
        %425 = vmatprep.subr.mxu0 0.0
        %426 = vmatpush1.msra.mxu0 %v410
        %427 = vmatprep.subr.mxu0 0.0
        %428 = vmatpush1.msra.mxu0 %v411
        %429 = vmatprep.subr.mxu0 0.0
        %430 = vmatpush1.msra.mxu0 %v412
        %431 = vmatprep.subr.mxu0 0.0
        %432 = vmatpush1.msra.mxu0 %v413
        %433 = vmatprep.subr.mxu0 0.0
        %434 = vmatpush1.msra.mxu0 0.0
        %435 = vmatprep.subr.mxu0 0.0
        %436 = vmatpush1.msra.mxu0 0.0
        %437 = vmatprep.subr.mxu0 0.0
        %438 = vmatpush1.msra.mxu0 0.0
        %439 = vmatprep.subr.mxu0 0.0
        %440 = vmatpush1.msra.mxu0 0.0
        %441 = vmatprep.subr.mxu0 0.0
        %442 = vmatpush1.msra.mxu0 0.0
        %443 = vmatprep.subr.mxu0 0.0
        %444 = vmatpush1.msra.mxu0 0.0
        %445 = vmatprep.subr.mxu0 0.0
        %446 = vmatpush1.msra.mxu0 0.0
        %447 = vmatprep.subr.mxu0 0.0
        %448 = vmatpush1.msra.mxu0 0.0
        %449 = vmatprep.subr.mxu0 0.0
        %450 = vmatpush1.msra.mxu0 0.0
        %451 = vmatprep.subr.mxu0 0.0
        %452 = vmatpush1.msra.mxu0 0.0
        %453 = vmatprep.subr.mxu0 0.0
        %454 = vmatpush1.msra.mxu0 0.0
        %455 = vmatprep.subr.mxu0 0.0
        %456 = vmatpush1.msra.mxu0 0.0
        %457 = vmatprep.subr.mxu0 0.0
        %458 = vmatpush1.msra.mxu0 0.0
        %459 = vmatprep.subr.mxu0 0.0
        %460 = vmatpush1.msra.mxu0 0.0
        %461 = vmatprep.subr.mxu0 0.0
        %462 = vmatpush1.msra.mxu0 0.0
        %463 = vmatprep.subr.mxu0 0.0
        %464 = vmatpush1.msra.mxu0 0.0
        %465 = vmatprep.subr.mxu0 0.0
        %466 = vmatpush1.msra.mxu0 0.0
        %467 = vmatprep.subr.mxu0 0.0
        %468 = vmatpush1.msra.mxu0 0.0
        %469 = vmatprep.subr.mxu0 0.0
        %470 = vmatpush1.msra.mxu0 0.0
        %471 = vmatprep.subr.mxu0 0.0
        %472 = vmatpush1.msra.mxu0 0.0
        %473 = vmatprep.subr.mxu0 0.0
        %474 = vmatpush1.msra.mxu0 0.0
        %475 = vmatprep.subr.mxu0 0.0
        %476 = vmatpush1.msra.mxu0 0.0
        %477 = vmatprep.subr.mxu0 0.0
        %478 = vmatpush1.msra.mxu0 0.0
        %479 = vmatprep.subr.mxu0 0.0
        %480 = vmatpush1.msra.mxu0 0.0
        %481 = vmatprep.subr.mxu0 0.0
        %482 = vmatpush1.msra.mxu0 0.0
        %483 = vmatprep.subr.mxu0 0.0
        %484 = vmatpush1.msra.mxu0 0.0
        %485 = vmatprep.subr.mxu0 0.0
        %486 = vmatpush1.msra.mxu0 0.0
        %487 = vmatprep.subr.mxu0 0.0
        %488 = vmatpush1.msra.mxu0 0.0
        %489 = vmatprep.mubr.f32.mxu0 0.0
        %490 = vmatmul.mubr.f32.gmra.mrb[0].mxu0 %v423
        %v491 = vpop.f32.mrb[0].mxu0
        %v492 = vadd.f32 %v419, %v491
        %v493 = vpop.f32.mrb[0].mxu0
        %494 = vdwg.mxu0
        %v495 = vmax.f32 %v492, 0.0
        %v496 = vld [vmem:[%s3] sm:$0xff]
        %v497 = vld [vmem:[%s3 + $0x8] sm:$0xff]
        %v498 = vld [vmem:[%s3 + $0x10] sm:$0xff]
        %v499 = vld [vmem:[%s3 + $0x18] sm:$0xff]
        %v500 = vld [vmem:[%s3 + $0x20] sm:$0xff]
        %v501 = vld [vmem:[%s3 + $0x28] sm:$0xff]
        %v502 = vld [vmem:[%s3 + $0x30] sm:$0xff]
        %v503 = vld [vmem:[%s3 + $0x38] sm:$0xff]
        %v504 = vld [vmem:[%s4] sm:$0x1]
        %v506 = vlaneseq
        %v507 = vshrl.u32 %v506, 7
        %v508 = vsub.s32 0, %v507
        %v509 = vrot.slane %v504, %v508
        %vm511 = vcmask 523264
        %v513 = vsel %vm511, %v495, 0
        %515 = vmatprep.subr.mxu0 0.0
        %516 = vmatpush1.msra.mxu0 %v496
        %517 = vmatprep.subr.mxu0 0.0
        %518 = vmatpush1.msra.mxu0 %v497
        %519 = vmatprep.subr.mxu0 0.0
        %520 = vmatpush1.msra.mxu0 %v498
        %521 = vmatprep.subr.mxu0 0.0
        %522 = vmatpush1.msra.mxu0 %v499
        %523 = vmatprep.subr.mxu0 0.0
        %524 = vmatpush1.msra.mxu0 %v500
        %525 = vmatprep.subr.mxu0 0.0
        %526 = vmatpush1.msra.mxu0 %v501
        %527 = vmatprep.subr.mxu0 0.0
        %528 = vmatpush1.msra.mxu0 %v502
        %529 = vmatprep.subr.mxu0 0.0
        %530 = vmatpush1.msra.mxu0 %v503
        %531 = vmatprep.subr.mxu0 0.0
        %532 = vmatpush1.msra.mxu0 0.0
        %533 = vmatprep.subr.mxu0 0.0
        %534 = vmatpush1.msra.mxu0 0.0
        %535 = vmatprep.subr.mxu0 0.0
        %536 = vmatpush1.msra.mxu0 0.0
        %537 = vmatprep.subr.mxu0 0.0
        %538 = vmatpush1.msra.mxu0 0.0
        %539 = vmatprep.subr.mxu0 0.0
        %540 = vmatpush1.msra.mxu0 0.0
        %541 = vmatprep.subr.mxu0 0.0
        %542 = vmatpush1.msra.mxu0 0.0
        %543 = vmatprep.subr.mxu0 0.0
        %544 = vmatpush1.msra.mxu0 0.0
        %545 = vmatprep.subr.mxu0 0.0
        %546 = vmatpush1.msra.mxu0 0.0
        %547 = vmatprep.subr.mxu0 0.0
        %548 = vmatpush1.msra.mxu0 0.0
        %549 = vmatprep.subr.mxu0 0.0
        %550 = vmatpush1.msra.mxu0 0.0
        %551 = vmatprep.subr.mxu0 0.0
        %552 = vmatpush1.msra.mxu0 0.0
        %553 = vmatprep.subr.mxu0 0.0
        %554 = vmatpush1.msra.mxu0 0.0
        %555 = vmatprep.subr.mxu0 0.0
        %556 = vmatpush1.msra.mxu0 0.0
        %557 = vmatprep.subr.mxu0 0.0
        %558 = vmatpush1.msra.mxu0 0.0
        %559 = vmatprep.subr.mxu0 0.0
        %560 = vmatpush1.msra.mxu0 0.0
        %561 = vmatprep.subr.mxu0 0.0
        %562 = vmatpush1.msra.mxu0 0.0
        %563 = vmatprep.subr.mxu0 0.0
        %564 = vmatpush1.msra.mxu0 0.0
        %565 = vmatprep.subr.mxu0 0.0
        %566 = vmatpush1.msra.mxu0 0.0
        %567 = vmatprep.subr.mxu0 0.0
        %568 = vmatpush1.msra.mxu0 0.0
        %569 = vmatprep.subr.mxu0 0.0
        %570 = vmatpush1.msra.mxu0 0.0
        %571 = vmatprep.subr.mxu0 0.0
        %572 = vmatpush1.msra.mxu0 0.0
        %573 = vmatprep.subr.mxu0 0.0
        %574 = vmatpush1.msra.mxu0 0.0
        %575 = vmatprep.subr.mxu0 0.0
        %576 = vmatpush1.msra.mxu0 0.0
        %577 = vmatprep.subr.mxu0 0.0
        %578 = vmatpush1.msra.mxu0 0.0
        %579 = vmatprep.mubr.f32.mxu0 0.0
        %580 = vmatmul.mubr.f32.gmra.mrb[0].mxu0 %v513
        %v581 = vpop.f32.mrb[0].mxu0
        %v582 = vadd.f32 %v509, %v581
        %v583 = vpop.f32.mrb[0].mxu0
        %584 = vdwg.mxu0
        %v585 = vmul.f32 %v582, 0.5
        %v586 = vmul.f32 %v585, 1.442695
        %v587 = vpow.pop %v586
        %589 = vrot.lane.b32.xlu0 %v587, 24
        %v590 = vpop.permute.xlu0 %589
        %v592 = vmul.f32 %v409, %v590
        %594 = vrot.lane.b32.xlu0 %v592, 88
        %v595 = vpop.permute.xlu0 %594
        %v597 = vadd.f32 %v582, %v595
        %v598 = vld [vmem:[%s5] sm:$0xff]
        %v599 = vld [vmem:[%s5 + $0x8] sm:$0xff]
        %v600 = vld [vmem:[%s6] sm:$0xff]
        %601 = vrot.lane.b32.xlu0 %v409, 96
        %v602 = vpop.permute.xlu0 %601
        %vm603 = vcmask 64512
        %v604 = vsel %vm603, %v602, 0
        %606 = vmatprep.subr.mxu0 0.0
        %607 = vmatpush1.msra.mxu0 %v600
        %608 = vmatprep.subr.mxu0 0.0
        %609 = vmatpush1.msra.mxu0 0.0
        %610 = vmatprep.subr.mxu0 0.0
        %611 = vmatpush1.msra.mxu0 0.0
        %612 = vmatprep.subr.mxu0 0.0
        %613 = vmatpush1.msra.mxu0 0.0
        %614 = vmatprep.subr.mxu0 0.0
        %615 = vmatpush1.msra.mxu0 0.0
        %616 = vmatprep.subr.mxu0 0.0
        %617 = vmatpush1.msra.mxu0 0.0
        %618 = vmatprep.subr.mxu0 0.0
        %619 = vmatpush1.msra.mxu0 0.0
        %620 = vmatprep.subr.mxu0 0.0
        %621 = vmatpush1.msra.mxu0 0.0
        %622 = vmatprep.subr.mxu0 0.0
        %623 = vmatpush1.msra.mxu0 0.0
        %624 = vmatprep.subr.mxu0 0.0
        %625 = vmatpush1.msra.mxu0 0.0
        %626 = vmatprep.subr.mxu0 0.0
        %627 = vmatpush1.msra.mxu0 0.0
        %628 = vmatprep.subr.mxu0 0.0
        %629 = vmatpush1.msra.mxu0 0.0
        %630 = vmatprep.subr.mxu0 0.0
        %631 = vmatpush1.msra.mxu0 0.0
        %632 = vmatprep.subr.mxu0 0.0
        %633 = vmatpush1.msra.mxu0 0.0
        %634 = vmatprep.subr.mxu0 0.0
        %635 = vmatpush1.msra.mxu0 0.0
        %636 = vmatprep.subr.mxu0 0.0
        %637 = vmatpush1.msra.mxu0 0.0
        %638 = vmatprep.subr.mxu0 0.0
        %639 = vmatpush1.msra.mxu0 0.0
        %640 = vmatprep.subr.mxu0 0.0
        %641 = vmatpush1.msra.mxu0 0.0
        %642 = vmatprep.subr.mxu0 0.0
        %643 = vmatpush1.msra.mxu0 0.0
        %644 = vmatprep.subr.mxu0 0.0
        %645 = vmatpush1.msra.mxu0 0.0
        %646 = vmatprep.subr.mxu0 0.0
        %647 = vmatpush1.msra.mxu0 0.0
        %648 = vmatprep.subr.mxu0 0.0
        %649 = vmatpush1.msra.mxu0 0.0
        %650 = vmatprep.subr.mxu0 0.0
        %651 = vmatpush1.msra.mxu0 0.0
        %652 = vmatprep.subr.mxu0 0.0
        %653 = vmatpush1.msra.mxu0 0.0
        %654 = vmatprep.subr.mxu0 0.0
        %655 = vmatpush1.msra.mxu0 0.0
        %656 = vmatprep.subr.mxu0 0.0
        %657 = vmatpush1.msra.mxu0 0.0
        %658 = vmatprep.subr.mxu0 0.0
        %659 = vmatpush1.msra.mxu0 0.0
        %660 = vmatprep.subr.mxu0 0.0
        %661 = vmatpush1.msra.mxu0 0.0
        %662 = vmatprep.subr.mxu0 0.0
        %663 = vmatpush1.msra.mxu0 0.0
        %664 = vmatprep.subr.mxu0 0.0
        %665 = vmatpush1.msra.mxu0 0.0
        %666 = vmatprep.subr.mxu0 0.0
        %667 = vmatpush1.msra.mxu0 0.0
        %668 = vmatprep.subr.mxu0 0.0
        %669 = vmatpush1.msra.mxu0 0.0
        %670 = vmatprep.mubr.f32.mxu0 0.0
        %671 = vmatmul.mubr.f32.gmra.mrb[0].mxu0 %v604
        %v672 = vpop.f32.mrb[0].mxu0
        %v673 = vadd.f32 0.0, %v672
        %v674 = vpop.f32.mrb[0].mxu0
        %675 = vdwg.mxu0
        %vm676 = vcmask 130048
        %v678 = vsel %vm676, %v597, 0
        %680 = vmatprep.subr.mxu0 0.0
        %681 = vmatpush1.msra.mxu0 %v598
        %682 = vmatprep.subr.mxu0 0.0
        %683 = vmatpush1.msra.mxu0 %v599
        %684 = vmatprep.subr.mxu0 0.0
        %685 = vmatpush1.msra.mxu0 0.0
        %686 = vmatprep.subr.mxu0 0.0
        %687 = vmatpush1.msra.mxu0 0.0
        %688 = vmatprep.subr.mxu0 0.0
        %689 = vmatpush1.msra.mxu0 0.0
        %690 = vmatprep.subr.mxu0 0.0
        %691 = vmatpush1.msra.mxu0 0.0
        %692 = vmatprep.subr.mxu0 0.0
        %693 = vmatpush1.msra.mxu0 0.0
        %694 = vmatprep.subr.mxu0 0.0
        %695 = vmatpush1.msra.mxu0 0.0
        %696 = vmatprep.subr.mxu0 0.0
        %697 = vmatpush1.msra.mxu0 0.0
        %698 = vmatprep.subr.mxu0 0.0
        %699 = vmatpush1.msra.mxu0 0.0
        %700 = vmatprep.subr.mxu0 0.0
        %701 = vmatpush1.msra.mxu0 0.0
        %702 = vmatprep.subr.mxu0 0.0
        %703 = vmatpush1.msra.mxu0 0.0
        %704 = vmatprep.subr.mxu0 0.0
        %705 = vmatpush1.msra.mxu0 0.0
        %706 = vmatprep.subr.mxu0 0.0
        %707 = vmatpush1.msra.mxu0 0.0
        %708 = vmatprep.subr.mxu0 0.0
        %709 = vmatpush1.msra.mxu0 0.0
        %710 = vmatprep.subr.mxu0 0.0
        %711 = vmatpush1.msra.mxu0 0.0
        %712 = vmatprep.subr.mxu0 0.0
        %713 = vmatpush1.msra.mxu0 0.0
        %714 = vmatprep.subr.mxu0 0.0
        %715 = vmatpush1.msra.mxu0 0.0
        %716 = vmatprep.subr.mxu0 0.0
        %717 = vmatpush1.msra.mxu0 0.0
        %718 = vmatprep.subr.mxu0 0.0
        %719 = vmatpush1.msra.mxu0 0.0
        %720 = vmatprep.subr.mxu0 0.0
        %721 = vmatpush1.msra.mxu0 0.0
        %722 = vmatprep.subr.mxu0 0.0
        %723 = vmatpush1.msra.mxu0 0.0
        %724 = vmatprep.subr.mxu0 0.0
        %725 = vmatpush1.msra.mxu0 0.0
        %726 = vmatprep.subr.mxu0 0.0
        %727 = vmatpush1.msra.mxu0 0.0
        %728 = vmatprep.subr.mxu0 0.0
        %729 = vmatpush1.msra.mxu0 0.0
        %730 = vmatprep.subr.mxu0 0.0
        %731 = vmatpush1.msra.mxu0 0.0
        %732 = vmatprep.subr.mxu0 0.0
        %733 = vmatpush1.msra.mxu0 0.0
        %734 = vmatprep.subr.mxu0 0.0
        %735 = vmatpush1.msra.mxu0 0.0
        %736 = vmatprep.subr.mxu0 0.0
        %737 = vmatpush1.msra.mxu0 0.0
        %738 = vmatprep.subr.mxu0 0.0
        %739 = vmatpush1.msra.mxu0 0.0
        %740 = vmatprep.subr.mxu0 0.0
        %741 = vmatpush1.msra.mxu0 0.0
        %742 = vmatprep.subr.mxu0 0.0
        %743 = vmatpush1.msra.mxu0 0.0
        %744 = vmatprep.mubr.f32.mxu0 0.0
        %745 = vmatmul.mubr.f32.gmra.mrb[0].mxu0 %v678
        %v746 = vpop.f32.mrb[0].mxu0
        %v747 = vadd.f32 %v673, %v746
        %v748 = vpop.f32.mrb[0].mxu0
        %749 = vdwg.mxu0
        %v750 = vld [vmem:[%s7] sm:$0x1]
        %v752 = vlaneseq
        %v753 = vshrl.u32 %v752, 7
        %v754 = vsub.s32 0, %v753
        %v755 = vrot.slane %v750, %v754
        %v757 = vadd.f32 %v747, %v755
        %v758 = vmax.f32 %v757, 0.0
        %v759 = vld [vmem:[%s8] sm:$0xff]
        %v760 = vld [vmem:[%s8 + $0x8] sm:$0xff]
        %v761 = vld [vmem:[%s8 + $0x10] sm:$0xff]
        %v762 = vld [vmem:[%s8 + $0x18] sm:$0xff]
        %v763 = vld [vmem:[%s8 + $0x20] sm:$0xff]
        %v764 = vld [vmem:[%s8 + $0x28] sm:$0xff]
        %v765 = vld [vmem:[%s8 + $0x30] sm:$0xff]
        %v766 = vld [vmem:[%s8 + $0x38] sm:$0xff]
        %v767 = vld [vmem:[%s9] sm:$0x1]
        %v769 = vlaneseq
        %v770 = vshrl.u32 %v769, 7
        %v771 = vsub.s32 0, %v770
        %v772 = vrot.slane %v767, %v771
        %v775 = vsel %vm511, %v758, 0
        %777 = vmatprep.subr.mxu0 0.0
        %778 = vmatpush1.msra.mxu0 %v759
        %779 = vmatprep.subr.mxu0 0.0
        %780 = vmatpush1.msra.mxu0 %v760
        %781 = vmatprep.subr.mxu0 0.0
        %782 = vmatpush1.msra.mxu0 %v761
        %783 = vmatprep.subr.mxu0 0.0
        %784 = vmatpush1.msra.mxu0 %v762
        %785 = vmatprep.subr.mxu0 0.0
        %786 = vmatpush1.msra.mxu0 %v763
        %787 = vmatprep.subr.mxu0 0.0
        %788 = vmatpush1.msra.mxu0 %v764
        %789 = vmatprep.subr.mxu0 0.0
        %790 = vmatpush1.msra.mxu0 %v765
        %791 = vmatprep.subr.mxu0 0.0
        %792 = vmatpush1.msra.mxu0 %v766
        %793 = vmatprep.subr.mxu0 0.0
        %794 = vmatpush1.msra.mxu0 0.0
        %795 = vmatprep.subr.mxu0 0.0
        %796 = vmatpush1.msra.mxu0 0.0
        %797 = vmatprep.subr.mxu0 0.0
        %798 = vmatpush1.msra.mxu0 0.0
        %799 = vmatprep.subr.mxu0 0.0
        %800 = vmatpush1.msra.mxu0 0.0
        %801 = vmatprep.subr.mxu0 0.0
        %802 = vmatpush1.msra.mxu0 0.0
        %803 = vmatprep.subr.mxu0 0.0
        %804 = vmatpush1.msra.mxu0 0.0
        %805 = vmatprep.subr.mxu0 0.0
        %806 = vmatpush1.msra.mxu0 0.0
        %807 = vmatprep.subr.mxu0 0.0
        %808 = vmatpush1.msra.mxu0 0.0
        %809 = vmatprep.subr.mxu0 0.0
        %810 = vmatpush1.msra.mxu0 0.0
        %811 = vmatprep.subr.mxu0 0.0
        %812 = vmatpush1.msra.mxu0 0.0
        %813 = vmatprep.subr.mxu0 0.0
        %814 = vmatpush1.msra.mxu0 0.0
        %815 = vmatprep.subr.mxu0 0.0
        %816 = vmatpush1.msra.mxu0 0.0
        %817 = vmatprep.subr.mxu0 0.0
        %818 = vmatpush1.msra.mxu0 0.0
        %819 = vmatprep.subr.mxu0 0.0
        %820 = vmatpush1.msra.mxu0 0.0
        %821 = vmatprep.subr.mxu0 0.0
        %822 = vmatpush1.msra.mxu0 0.0
        %823 = vmatprep.subr.mxu0 0.0
        %824 = vmatpush1.msra.mxu0 0.0
        %825 = vmatprep.subr.mxu0 0.0
        %826 = vmatpush1.msra.mxu0 0.0
        %827 = vmatprep.subr.mxu0 0.0
        %828 = vmatpush1.msra.mxu0 0.0
        %829 = vmatprep.subr.mxu0 0.0
        %830 = vmatpush1.msra.mxu0 0.0
        %831 = vmatprep.subr.mxu0 0.0
        %832 = vmatpush1.msra.mxu0 0.0
        %833 = vmatprep.subr.mxu0 0.0
        %834 = vmatpush1.msra.mxu0 0.0
        %835 = vmatprep.subr.mxu0 0.0
        %836 = vmatpush1.msra.mxu0 0.0
        %837 = vmatprep.subr.mxu0 0.0
        %838 = vmatpush1.msra.mxu0 0.0
        %839 = vmatprep.subr.mxu0 0.0
        %840 = vmatpush1.msra.mxu0 0.0
        %841 = vmatprep.mubr.f32.mxu0 0.0
        %842 = vmatmul.mubr.f32.gmra.mrb[0].mxu0 %v775
        %v843 = vpop.f32.mrb[0].mxu0
        %v844 = vadd.f32 %v772, %v843
        %v845 = vpop.f32.mrb[0].mxu0
        %846 = vdwg.mxu0
        %v847 = vmax.f32 %v844, 0.0
        %v848 = vld [vmem:[%s10] sm:$0xff]
        %v849 = vld [vmem:[%s10 + $0x8] sm:$0xff]
        %v850 = vld [vmem:[%s10 + $0x10] sm:$0xff]
        %v851 = vld [vmem:[%s10 + $0x18] sm:$0xff]
        %v852 = vld [vmem:[%s10 + $0x20] sm:$0xff]
        %v853 = vld [vmem:[%s10 + $0x28] sm:$0xff]
        %v854 = vld [vmem:[%s10 + $0x30] sm:$0xff]
        %v855 = vld [vmem:[%s10 + $0x38] sm:$0xff]
        %v856 = vld [vmem:[%s11] sm:$0x1]
        %v858 = vlaneseq
        %v859 = vshrl.u32 %v858, 7
        %v860 = vsub.s32 0, %v859
        %v861 = vrot.slane %v856, %v860
        %v864 = vsel %vm511, %v847, 0
        %866 = vmatprep.subr.mxu0 0.0
        %867 = vmatpush1.msra.mxu0 %v848
        %868 = vmatprep.subr.mxu0 0.0
        %869 = vmatpush1.msra.mxu0 %v849
        %870 = vmatprep.subr.mxu0 0.0
        %871 = vmatpush1.msra.mxu0 %v850
        %872 = vmatprep.subr.mxu0 0.0
        %873 = vmatpush1.msra.mxu0 %v851
        %874 = vmatprep.subr.mxu0 0.0
        %875 = vmatpush1.msra.mxu0 %v852
        %876 = vmatprep.subr.mxu0 0.0
        %877 = vmatpush1.msra.mxu0 %v853
        %878 = vmatprep.subr.mxu0 0.0
        %879 = vmatpush1.msra.mxu0 %v854
        %880 = vmatprep.subr.mxu0 0.0
        %881 = vmatpush1.msra.mxu0 %v855
        %882 = vmatprep.subr.mxu0 0.0
        %883 = vmatpush1.msra.mxu0 0.0
        %884 = vmatprep.subr.mxu0 0.0
        %885 = vmatpush1.msra.mxu0 0.0
        %886 = vmatprep.subr.mxu0 0.0
        %887 = vmatpush1.msra.mxu0 0.0
        %888 = vmatprep.subr.mxu0 0.0
        %889 = vmatpush1.msra.mxu0 0.0
        %890 = vmatprep.subr.mxu0 0.0
        %891 = vmatpush1.msra.mxu0 0.0
        %892 = vmatprep.subr.mxu0 0.0
        %893 = vmatpush1.msra.mxu0 0.0
        %894 = vmatprep.subr.mxu0 0.0
        %895 = vmatpush1.msra.mxu0 0.0
        %896 = vmatprep.subr.mxu0 0.0
        %897 = vmatpush1.msra.mxu0 0.0
        %898 = vmatprep.subr.mxu0 0.0
        %899 = vmatpush1.msra.mxu0 0.0
        %900 = vmatprep.subr.mxu0 0.0
        %901 = vmatpush1.msra.mxu0 0.0
        %902 = vmatprep.subr.mxu0 0.0
        %903 = vmatpush1.msra.mxu0 0.0
        %904 = vmatprep.subr.mxu0 0.0
        %905 = vmatpush1.msra.mxu0 0.0
        %906 = vmatprep.subr.mxu0 0.0
        %907 = vmatpush1.msra.mxu0 0.0
        %908 = vmatprep.subr.mxu0 0.0
        %909 = vmatpush1.msra.mxu0 0.0
        %910 = vmatprep.subr.mxu0 0.0
        %911 = vmatpush1.msra.mxu0 0.0
        %912 = vmatprep.subr.mxu0 0.0
        %913 = vmatpush1.msra.mxu0 0.0
        %914 = vmatprep.subr.mxu0 0.0
        %915 = vmatpush1.msra.mxu0 0.0
        %916 = vmatprep.subr.mxu0 0.0
        %917 = vmatpush1.msra.mxu0 0.0
        %918 = vmatprep.subr.mxu0 0.0
        %919 = vmatpush1.msra.mxu0 0.0
        %920 = vmatprep.subr.mxu0 0.0
        %921 = vmatpush1.msra.mxu0 0.0
        %922 = vmatprep.subr.mxu0 0.0
        %923 = vmatpush1.msra.mxu0 0.0
        %924 = vmatprep.subr.mxu0 0.0
        %925 = vmatpush1.msra.mxu0 0.0
        %926 = vmatprep.subr.mxu0 0.0
        %927 = vmatpush1.msra.mxu0 0.0
        %928 = vmatprep.subr.mxu0 0.0
        %929 = vmatpush1.msra.mxu0 0.0
        %930 = vmatprep.mubr.f32.mxu0 0.0
        %931 = vmatmul.mubr.f32.gmra.mrb[0].mxu0 %v864
        %v932 = vpop.f32.mrb[0].mxu0
        %v933 = vadd.f32 %v861, %v932
        %v934 = vpop.f32.mrb[0].mxu0
        %935 = vdwg.mxu0
        %937 = vrot.lane.b32.xlu0 %v582, 32
        %v938 = vpop.permute.xlu0 %937
        %v940 = vsel %vm421, %v933, %v938
        %941 = vst.msk [vmem:[%s404] sm:$0xff] %vm511, %v940
        %s942 = sand.u32 %s291, 1
        %s943 = scalar_lea.sflag [#allocation3], %s942
        %s944 = sand.u32 %s291, 1
        %s945 = smul.addr %s944, 8
        %s946 = scalar_lea.vmem [#allocation2], %s945
        // Predicated region
        $region69: #{tpu_custom_call.1} parent=67 // pred_check
          %p947 = pneg %p301
        $region70: #{tpu_custom_call.1} parent=67 // pred_check_branch
          %949 = sbr.rel (%p947) target = $region72
        $region71: #{tpu_custom_call.1} parent=67 // pred_region
          %s951 = ssub.s32 128, 128
          %952 = vsyncadd %s943, %s951
          %s953 = smul.addr %s26, 128
          %s954 = scalar_lea.hbm %s12, %s953
          %s956 = sshll.u32 %s946, 4
          %s957 = int_to_ptr.vmem [resolvable:$true] %s956
          %959 = dma.vmem_to_hbm [thread:$0]  %s957, 128, %s954, %s943
        $region72: #{tpu_custom_call.1} parent=67 // pred_fallthru
          _
      $region68: #{tpu_custom_call.1} parent=5 // pred_fallthru
        _
      %p960 = scmp.le.s32.totalorder 2, %s21
      // Predicated region
      $region73: #{tpu_custom_call.1} parent=5 // pred_check
        %p961 = pneg %p960
      $region74: #{tpu_custom_call.1} parent=5 // pred_check_branch
        %963 = sbr.rel (%p961) target = $region76
      $region75: #{tpu_custom_call.1} parent=5 // pred_region
        %s964 = ssub.s32 %s21, 2
        // Predicated region
        $region77: #{tpu_custom_call.1} parent=75 // pred_check
          %p965 = pneg %p307
        $region78: #{tpu_custom_call.1} parent=75 // pred_check_branch
          %967 = sbr.rel (%p965) target = $region80
        $region79: #{tpu_custom_call.1} parent=75 // pred_region
          %s968 = sand.u32 %s292, 1
          %s969 = scalar_lea.sflag [#allocation3], %s968
          %s970 = sand.u32 %s292, 1
          %s971 = smul.addr %s970, 8
          %s972 = scalar_lea.vmem [#allocation2], %s971
          %973 = dma.done %s969, 128
        $region80: #{tpu_custom_call.1} parent=75 // pred_fallthru
          _
      $region76: #{tpu_custom_call.1} parent=5 // pred_fallthru
        _
    $region6: #{tpu_custom_call.1} parent=1 // loop_footer
      %s25 = sadd.s32 1, %s21
    $region7: #{tpu_custom_call.1} parent=1 // loop_footer_branch
      %20 = sbr.rel target = $region3
    $region8: #{tpu_custom_call.1} parent=1 // loop_exit
      _
    %974 = vsyncpa [#allocation3], 1
    %s975 = scalar_lea.sflag [#allocation3], 1
    %976 = vsyncpa %s975, 1

</llo_original>
